<compile_context>
chip_gen: v7x
topology: tpu7x:2x2x1
jax: 0.10.0
libtpu: 0.0.40
codegen_flags: <defaults>
</compile_context>

<pallas_src>
import functools

import jax
import jax.numpy as jnp
from jax.experimental import pallas as pl
from jax.experimental.pallas import tpu as pltpu


def _round_up(x, m):
    return ((x + m - 1) // m) * m


_VMEM_LIMIT_BYTES = 32 * 1024 * 1024   # explicit scoped-VMEM request, safe on v5e/v6e/v7x
_VMEM_TILE_BUDGET = 24 * 1024 * 1024   # tile-selection budget, leaves Mosaic scratch headroom


def _choose_tile(M, K_pad, E_pad):
    """Largest MXU-friendly row tile whose double-buffered footprint fits the budget."""
    if M < 8:
        return M
    candidates = [t for t in (1024, 512, 256, 128, 64, 32, 16, 8) if t <= M]
    for t in candidates:
        # 2x (tm,K) patch buffers + 2x (K,E) weight buffers (conservative: the
        # constant index_map means it is fetched once, but both pipeline
        # buffers are still allocated) + 2x (1,E) bias + 2x (tm,E) out, f32.
        footprint = 4 * (2 * t * K_pad + 2 * K_pad * E_pad + 2 * E_pad + 2 * t * E_pad)
        if footprint <= _VMEM_TILE_BUDGET:
            return t
    return candidates[-1]


def _patch_embed_kernel(p_ref, w_ref, b_ref, o_ref):
    # p_ref: (tm, K_pad)   flattened-patch tile (streamed per grid step)
    # w_ref: (K_pad, E_pad) projection weight (VMEM-resident across the grid)
    # b_ref: (1, E_pad)    bias (VMEM-resident)
    # o_ref: (tm, E_pad)   projected patch-embedding tile
    acc = jnp.dot(p_ref[...], w_ref[...], preferred_element_type=jnp.float32)
    o_ref[...] = (acc + b_ref[...]).astype(o_ref.dtype)


def prepare_proj_params(weight, bias):
    """One-time prep of the Conv2d projection (hoisted out of the per-call path).

    weight: [embed_dim, C, P, P] (PyTorch Conv2d layout), bias: [embed_dim].
    Returns (w_mat [K_pad, E_pad], b_mat [1, E_pad]) with K ordered (c, ph, pw);
    pads are real zeros so padded K rows / E columns contribute nothing.
    """
    E, C, P, _ = weight.shape
    K = C * P * P
    K_pad = _round_up(K, 128)
    E_pad = _round_up(E, 128)
    w_mat = weight.reshape(E, K).T
    b_mat = bias.reshape(1, E)
    if (K_pad, E_pad) != (K, E):
        w_mat = jnp.pad(w_mat, ((0, K_pad - K), (0, E_pad - E)))
        b_mat = jnp.pad(b_mat, ((0, 0), (0, E_pad - E)))
    return w_mat, b_mat


@functools.partial(jax.jit, static_argnames=("patch_size", "embed_dim"))
def patch_embed(x, w_mat, b_mat, *, patch_size, embed_dim):
    """x: [B, C, H, W] (NCHW, like PyTorch).  Returns [B, num_patches, embed_dim].
    norm_layer=None -> Identity, so no normalization is applied."""
    B, C, H, W = x.shape
    P = patch_size
    assert H % P == 0 and W % P == 0, "image size must be divisible by patch size"
    gh, gw = H // P, W // P
    num_patches = gh * gw
    M = B * num_patches
    K = C * P * P
    K_pad, E_pad = w_mat.shape
    E = embed_dim

    # Glue: NCHW image -> patch matrix [M, K] with K ordered (c, ph, pw).
    # XLA fuses the reshape/transpose (and the optional K zero-pad) into one
    # copy; no M padding is done (ragged last grid block instead).
    patches = x.reshape(B, C, gh, P, gw, P).transpose(0, 2, 4, 1, 3, 5).reshape(M, K)
    if K_pad != K:
        patches = jnp.pad(patches, ((0, 0), (0, K_pad - K)))

    tm = _choose_tile(M, K_pad, E_pad)
    grid = (pl.cdiv(M, tm),)

    out = pl.pallas_call(
        _patch_embed_kernel,
        out_shape=jax.ShapeDtypeStruct((M, E_pad), x.dtype),
        grid_spec=pltpu.PrefetchScalarGridSpec(
            num_scalar_prefetch=0,
            grid=grid,
            in_specs=[
                pl.BlockSpec((tm, K_pad), lambda i: (i, 0)),     # streamed patch tiles
                pl.BlockSpec((K_pad, E_pad), lambda i: (0, 0)),  # resident weight
                pl.BlockSpec((1, E_pad), lambda i: (0, 0)),      # resident bias
            ],
            out_specs=pl.BlockSpec((tm, E_pad), lambda i: (i, 0)),
        ),
        compiler_params=pltpu.CompilerParams(
            dimension_semantics=("parallel",),
            vmem_limit_bytes=_VMEM_LIMIT_BYTES,
        ),
    )(patches, w_mat, b_mat)

    if E_pad != E:
        out = out[:, :E]
    return out.reshape(B, num_patches, E)


def _reference(x, weight, bias, patch_size):
    # Pure-JAX reference: strided conv == patch extraction + dense projection.
    B, C, H, W = x.shape
    P = patch_size
    gh, gw = H // P, W // P
    E = weight.shape[0]
    patches = x.reshape(B, C, gh, P, gw, P).transpose(0, 2, 4, 1, 3, 5)
    patches = patches.reshape(B, gh * gw, C * P * P)
    return jnp.einsum("bnk,ek->bne", patches, weight.reshape(E, -1)) + bias[None, None, :]


if __name__ == "__main__":
    # Small config consistent with the module: img_size=16, patch_size=4,
    # in_c=4, embed_dim=32, batch=2 -> num_patches = 16.
    B, C, H, W = 2, 4, 16, 16
    P = 4
    E = 32

    key = jax.random.PRNGKey(0)
    kx, kw, kb = jax.random.split(key, 3)
    x = jax.random.normal(kx, (B, C, H, W), dtype=jnp.float32)
    weight = jax.random.normal(kw, (E, C, P, P), dtype=jnp.float32) * 0.02
    bias = jax.random.normal(kb, (E,), dtype=jnp.float32) * 0.02

    # Weight-side prep done once (module init), not per forward call.
    w_mat, b_mat = prepare_proj_params(weight, bias)

    out = patch_embed(x, w_mat, b_mat, patch_size=P, embed_dim=E)
    out = jax.block_until_ready(out)

    ref = _reference(x, weight, bias, P)
    assert out.shape == (B, (H // P) * (W // P), E), out.shape
    assert jnp.allclose(out, ref, atol=1e-5, rtol=1e-5), float(jnp.max(jnp.abs(out - ref)))

    print("KERNEL_OK")
</pallas_src>

<mosaic_0001>
module attributes {stable_mosaic.version = 11 : i64} {
  func.func @_patch_embed_kernel(%arg0: i32, %arg1: memref<32x128xf32, #tpu.memory_space<vmem>>, %arg2: memref<128x128xf32, #tpu.memory_space<vmem>>, %arg3: memref<1x128xf32, #tpu.memory_space<vmem>>, %arg4: memref<32x128xf32, #tpu.memory_space<vmem>>) attributes {dimension_semantics = [#tpu.dimension_semantics<parallel>], iteration_bounds = array<i64: 1>, scalar_prefetch = 0 : i64, scratch_operands = 0 : i64, tpu.core_type = #tpu.core_type<tc>, window_params = [{transform_indices = @transform_0, window_bounds = array<i64: 32, 128>}, {pipeline_mode = #tpu.pipeline_mode<synchronous>, transform_indices = @transform_1, window_bounds = array<i64: 128, 128>}, {pipeline_mode = #tpu.pipeline_mode<synchronous>, transform_indices = @transform_2, window_bounds = array<i64: 1, 128>}, {transform_indices = @transform_3, window_bounds = array<i64: 32, 128>}]} {
    %c0 = arith.constant 0 : index
    %c0_0 = arith.constant 0 : index
    %0 = vector.load %arg1[%c0, %c0_0] : memref<32x128xf32, #tpu.memory_space<vmem>>, vector<32x128xf32>
    %c0_1 = arith.constant 0 : index
    %c0_2 = arith.constant 0 : index
    %1 = vector.load %arg2[%c0_1, %c0_2] : memref<128x128xf32, #tpu.memory_space<vmem>>, vector<128x128xf32>
    %cst = arith.constant dense<0.000000e+00> : vector<32x128xf32>
    %2 = tpu.matmul %0, %1, %cst {dimension_numbers = #tpu.dot_dimension_numbers<[1], [0], [0], [1], [0, 0, 1, 1], [], []>} : vector<32x128xf32>, vector<128x128xf32>, vector<32x128xf32> -> vector<32x128xf32>
    %c0_3 = arith.constant 0 : index
    %c0_4 = arith.constant 0 : index
    %3 = vector.load %arg3[%c0_3, %c0_4] : memref<1x128xf32, #tpu.memory_space<vmem>>, vector<1x128xf32>
    %4 = vector.broadcast %3 : vector<1x128xf32> to vector<32x128xf32>
    %5 = arith.addf %2, %4 : vector<32x128xf32>
    %c0_5 = arith.constant 0 : index
    %c0_6 = arith.constant 0 : index
    %6 = vector.load %arg4[%c0_5, %c0_6] : memref<32x128xf32, #tpu.memory_space<vmem>>, vector<32x128xf32>
    tpu.vector_store %arg4[%c0_5, %c0_6], %5 {strides = array<i32>} : memref<32x128xf32, #tpu.memory_space<vmem>>, vector<32x128xf32>,
    return
  }
  func.func @transform_0(%arg0: i32) -> (i32, i32) {
    %c0_i32 = arith.constant 0 : i32
    %c0_i32_0 = arith.constant 0 : i32
    return %arg0, %c0_i32 : i32, i32
  }
  func.func @transform_1(%arg0: i32) -> (i32, i32) {
    %c0_i32 = arith.constant 0 : i32
    %c0_i32_0 = arith.constant 0 : i32
    %c0_i32_1 = arith.constant 0 : i32
    return %c0_i32, %c0_i32_0 : i32, i32
  }
  func.func @transform_2(%arg0: i32) -> (i32, i32) {
    %c0_i32 = arith.constant 0 : i32
    %c0_i32_0 = arith.constant 0 : i32
    %c0_i32_1 = arith.constant 0 : i32
    return %c0_i32, %c0_i32_0 : i32, i32
  }
  func.func @transform_3(%arg0: i32) -> (i32, i32) {
    %c0_i32 = arith.constant 0 : i32
    %c0_i32_0 = arith.constant 0 : i32
    return %arg0, %c0_i32 : i32, i32
  }
}

</mosaic_0001>

<llo_original>
// kernel: patch_embed.1
$region0: #{patch_embed.1}
  #allocation0 [shape = 'u32[]', space=smem, size = 0x4, offset = 0x4, fixed_abs, tag = 'smem constant byte address 0x4 - core index']
  #allocation1 [shape = 'u32[144,128]{1,0:T(1,128)}', space=vmem, size = 0x12000, scoped, tag = 'internal scratch']
  %s0 = inlined_call_operand.vmem [shape: f32[32,128], index: 0, kind: input, shape index: {}]
  %s1 = inlined_call_operand.vmem [shape: f32[128,128], index: 1, kind: input, shape index: {}]
  %s2 = inlined_call_operand.vmem [shape: f32[1,128], index: 2, kind: input, shape index: {}]
  %s3 = inlined_call_operand.hbm [shape: f32[32,128], index: 3, kind: output, shape index: {}]
  %s4 = sld [smem:[#allocation0]]
  $region22: #{patch_embed.1} parent=0
    _
  %s6 = ssub.s32 1, %s4
  %s7 = scalar_select 0, %s6, %s4
  $region1: #{patch_embed.1} parent=0
    #allocation2 [shape = 'u8[16384]{0}', space=vmem, size = 0x4000, scoped, tag = 'output window, operand 0, single buffered']
    #allocation3 [shape = 's32[1]{0}', space=sflag, size = 0x4, scoped, tag = 'scoped memory for patch_embed.1']
    %8 = vsyncpa [#allocation3], 0
    // Predicated region
    $region2: #{patch_embed.1} parent=1 // pred_check
      _
    $region3: #{patch_embed.1} parent=1 // pred_check_branch
      %10 = sbr.rel (0) target = $region5
    $region4: #{patch_embed.1} parent=1 // pred_region
      _
    $region5: #{patch_embed.1} parent=1 // pred_fallthru
      _
    // Predicated region
    $region6: #{patch_embed.1} parent=1 // pred_check
      _
    $region7: #{patch_embed.1} parent=1 // pred_check_branch
      %12 = sbr.rel (0) target = $region9
    $region8: #{patch_embed.1} parent=1 // pred_region
      _
    $region9: #{patch_embed.1} parent=1 // pred_fallthru
      _
    // Predicated region
    $region10: #{patch_embed.1} parent=1 // pred_check
      _
    $region11: #{patch_embed.1} parent=1 // pred_check_branch
      %14 = sbr.rel (0) target = $region13
    $region12: #{patch_embed.1} parent=1 // pred_region
      _
    $region13: #{patch_embed.1} parent=1 // pred_fallthru
      _
    %v15 = vld [vmem:[%s0] sm:$0xff]
    %v16 = vld [vmem:[%s0 + $0x8] sm:$0xff]
    %v17 = vld [vmem:[%s0 + $0x10] sm:$0xff]
    %v18 = vld [vmem:[%s0 + $0x18] sm:$0xff]
    %v19 = vld [vmem:[%s1] sm:$0xff]
    %v20 = vld [vmem:[%s1 + $0x8] sm:$0xff]
    %v21 = vld [vmem:[%s1 + $0x10] sm:$0xff]
    %v22 = vld [vmem:[%s1 + $0x18] sm:$0xff]
    %v23 = vld [vmem:[%s1 + $0x20] sm:$0xff]
    %v24 = vld [vmem:[%s1 + $0x28] sm:$0xff]
    %v25 = vld [vmem:[%s1 + $0x30] sm:$0xff]
    %v26 = vld [vmem:[%s1 + $0x38] sm:$0xff]
    %v27 = vld [vmem:[%s1 + $0x40] sm:$0xff]
    %v28 = vld [vmem:[%s1 + $0x48] sm:$0xff]
    %v29 = vld [vmem:[%s1 + $0x50] sm:$0xff]
    %v30 = vld [vmem:[%s1 + $0x58] sm:$0xff]
    %v31 = vld [vmem:[%s1 + $0x60] sm:$0xff]
    %v32 = vld [vmem:[%s1 + $0x68] sm:$0xff]
    %v33 = vld [vmem:[%s1 + $0x70] sm:$0xff]
    %v34 = vld [vmem:[%s1 + $0x78] sm:$0xff]
    %v35 = vld [vmem:[%s2] sm:$0x1]
    %v37 = vlaneseq
    %v38 = vshrl.u32 %v37, 7
    %v39 = vsub.s32 0, %v38
    %v40 = vrot.slane %v35, %v39
    %42 = vmatprep.subr.mxu0 0.0
    %43 = vmatpush1.msra.mxu0 %v19
    %44 = vmatprep.subr.mxu0 0.0
    %45 = vmatpush1.msra.mxu0 %v20
    %46 = vmatprep.subr.mxu0 0.0
    %47 = vmatpush1.msra.mxu0 %v21
    %48 = vmatprep.subr.mxu0 0.0
    %49 = vmatpush1.msra.mxu0 %v22
    %50 = vmatprep.subr.mxu0 0.0
    %51 = vmatpush1.msra.mxu0 %v23
    %52 = vmatprep.subr.mxu0 0.0
    %53 = vmatpush1.msra.mxu0 %v24
    %54 = vmatprep.subr.mxu0 0.0
    %55 = vmatpush1.msra.mxu0 %v25
    %56 = vmatprep.subr.mxu0 0.0
    %57 = vmatpush1.msra.mxu0 %v26
    %58 = vmatprep.subr.mxu0 0.0
    %59 = vmatpush1.msra.mxu0 %v27
    %60 = vmatprep.subr.mxu0 0.0
    %61 = vmatpush1.msra.mxu0 %v28
    %62 = vmatprep.subr.mxu0 0.0
    %63 = vmatpush1.msra.mxu0 %v29
    %64 = vmatprep.subr.mxu0 0.0
    %65 = vmatpush1.msra.mxu0 %v30
    %66 = vmatprep.subr.mxu0 0.0
    %67 = vmatpush1.msra.mxu0 %v31
    %68 = vmatprep.subr.mxu0 0.0
    %69 = vmatpush1.msra.mxu0 %v32
    %70 = vmatprep.subr.mxu0 0.0
    %71 = vmatpush1.msra.mxu0 %v33
    %72 = vmatprep.subr.mxu0 0.0
    %73 = vmatpush1.msra.mxu0 %v34
    %74 = vmatprep.subr.mxu0 0.0
    %75 = vmatpush1.msra.mxu0 0.0
    %76 = vmatprep.subr.mxu0 0.0
    %77 = vmatpush1.msra.mxu0 0.0
    %78 = vmatprep.subr.mxu0 0.0
    %79 = vmatpush1.msra.mxu0 0.0
    %80 = vmatprep.subr.mxu0 0.0
    %81 = vmatpush1.msra.mxu0 0.0
    %82 = vmatprep.subr.mxu0 0.0
    %83 = vmatpush1.msra.mxu0 0.0
    %84 = vmatprep.subr.mxu0 0.0
    %85 = vmatpush1.msra.mxu0 0.0
    %86 = vmatprep.subr.mxu0 0.0
    %87 = vmatpush1.msra.mxu0 0.0
    %88 = vmatprep.subr.mxu0 0.0
    %89 = vmatpush1.msra.mxu0 0.0
    %90 = vmatprep.subr.mxu0 0.0
    %91 = vmatpush1.msra.mxu0 0.0
    %92 = vmatprep.subr.mxu0 0.0
    %93 = vmatpush1.msra.mxu0 0.0
    %94 = vmatprep.subr.mxu0 0.0
    %95 = vmatpush1.msra.mxu0 0.0
    %96 = vmatprep.subr.mxu0 0.0
    %97 = vmatpush1.msra.mxu0 0.0
    %98 = vmatprep.subr.mxu0 0.0
    %99 = vmatpush1.msra.mxu0 0.0
    %100 = vmatprep.subr.mxu0 0.0
    %101 = vmatpush1.msra.mxu0 0.0
    %102 = vmatprep.subr.mxu0 0.0
    %103 = vmatpush1.msra.mxu0 0.0
    %104 = vmatprep.subr.mxu0 0.0
    %105 = vmatpush1.msra.mxu0 0.0
    %106 = vmatprep.mubr.f32.mxu0 0.0
    %107 = vmatmul.mubr.f32.gmra.mrb[0].mxu0 %v15
    %v108 = vpop.f32.mrb[0].mxu0
    %v109 = vadd.f32 %v40, %v108
    %v110 = vpop.f32.mrb[0].mxu0
    %111 = vmatprep.mubr.f32.mxu0 0.0
    %112 = vmatmul.mubr.f32.gmra.mrb[0].mxu0 %v16
    %v113 = vpop.f32.mrb[0].mxu0
    %v114 = vadd.f32 %v40, %v113
    %v115 = vpop.f32.mrb[0].mxu0
    %116 = vmatprep.mubr.f32.mxu0 0.0
    %117 = vmatmul.mubr.f32.gmra.mrb[0].mxu0 %v17
    %v118 = vpop.f32.mrb[0].mxu0
    %v119 = vadd.f32 %v40, %v118
    %v120 = vpop.f32.mrb[0].mxu0
    %121 = vmatprep.mubr.f32.mxu0 0.0
    %122 = vmatmul.mubr.f32.gmra.mrb[0].mxu0 %v18
    %v123 = vpop.f32.mrb[0].mxu0
    %v124 = vadd.f32 %v40, %v123
    %v125 = vpop.f32.mrb[0].mxu0
    %126 = vdwg.mxu0
    %127 = vst [vmem:[#allocation2] sm:$0xff] %v109
    %128 = vst [vmem:[#allocation2 + $0x8] sm:$0xff] %v114
    %129 = vst [vmem:[#allocation2 + $0x10] sm:$0xff] %v119
    %130 = vst [vmem:[#allocation2 + $0x18] sm:$0xff] %v124
    // Predicated region
    $region14: #{patch_embed.1} parent=1 // pred_check
      _
    $region15: #{patch_embed.1} parent=1 // pred_check_branch
      %132 = sbr.rel (0) target = $region17
    $region16: #{patch_embed.1} parent=1 // pred_region
      %s134 = ssub.s32 512, 512
      %135 = vsyncadd [#allocation3], %s134
      %s136 = sshll.u32 [#allocation2], 4
      %s137 = int_to_ptr.vmem [resolvable:$true] %s136
      %142 = dma.vmem_to_hbm [thread:$0]  %s137, 512, %s3, [#allocation3], 128, 128, 8
    $region17: #{patch_embed.1} parent=1 // pred_fallthru
      _
    // Predicated region
    $region18: #{patch_embed.1} parent=1 // pred_check
      _
    $region19: #{patch_embed.1} parent=1 // pred_check_branch
      %144 = sbr.rel (0) target = $region21
    $region20: #{patch_embed.1} parent=1 // pred_region
      %145 = dma.done [#allocation3], 512
    $region21: #{patch_embed.1} parent=1 // pred_fallthru
      _
    %146 = vsyncpa [#allocation3], 1

</llo_original>
